<compile_context>
chip_gen: v7x
topology: tpu7x:2x2x1
jax: 0.10.0
libtpu: 0.0.40
codegen_flags: <defaults>
</compile_context>

<pallas_src>
import jax
import jax.numpy as jnp
from jax import lax
from jax.experimental import pallas as pl
from jax.experimental.pallas import tpu as pltpu


def _inner_product_decoder_kernel(z0_ref, z1_ref, out_ref):
    # z0_ref: (tn, D), z1_ref: (tm, D), out_ref: (tn, tm)
    logits = lax.dot_general(
        z0_ref[...],
        z1_ref[...],
        dimension_numbers=(((1,), (1,)), ((), ())),  # contract on D; no transpose
        preferred_element_type=jnp.float32,
    )
    out_ref[...] = jax.nn.sigmoid(logits).astype(out_ref.dtype)


def _round_up(x, m):
    return (x + m - 1) // m * m


def _choose_tiles(N, M, D, itemsize, budget_bytes=12 * 1024 * 1024):
    """Pick (tn, tm): full extent when the dim is small, else a 128-multiple
    tile sized so double-buffered blocks + f32 intermediate fit a conservative
    VMEM budget (safe on v5e's 16 MiB default and v7x's 32 MiB scoped)."""
    for t in (1024, 512, 256, 128):
        tn = N if N <= t else t
        tm = M if M <= t else t
        need = 2 * (tn * D + tm * D + tn * tm) * itemsize + tn * tm * 4
        if need <= budget_bytes:
            return tn, tm
    return min(N, 128), min(M, 128)


def inner_product_decoder(z_0, z_1):
    """Pallas implementation of InnerProductDecoder.forward.

    Args:
      z_0: (B, N, D) float array.
      z_1: (B, M, D) float array.
    Returns:
      (B, 1, N, M) array = sigmoid(z_0 @ z_1.transpose(1, 2))[:, None]
    """
    B, N, D = z_0.shape
    Bz, M, Dz = z_1.shape
    assert B == Bz and D == Dz, "batch / hidden dims must match"

    itemsize = jnp.dtype(z_0.dtype).itemsize
    tn, tm = _choose_tiles(N, M, D, itemsize)

    # Pad N / M up to tile multiples (pad region is sliced off afterwards).
    Np = _round_up(N, tn)
    Mp = _round_up(M, tm)
    if Np != N:
        z_0 = jnp.pad(z_0, ((0, 0), (0, Np - N), (0, 0)))
    if Mp != M:
        z_1 = jnp.pad(z_1, ((0, 0), (0, Mp - M), (0, 0)))

    # M-tile axis innermost: z0 block index constant across it -> stays resident.
    grid = (B, Np // tn, Mp // tm)

    cost = pl.CostEstimate(
        flops=2 * B * Np * Mp * D,
        transcendentals=B * Np * Mp,
        bytes_accessed=(B * Np * D + B * Mp * D + B * Np * Mp) * itemsize,
    )

    out = pl.pallas_call(
        _inner_product_decoder_kernel,
        out_shape=jax.ShapeDtypeStruct((B, Np, Mp), z_0.dtype),
        grid_spec=pltpu.PrefetchScalarGridSpec(
            num_scalar_prefetch=0,
            grid=grid,
            in_specs=[
                pl.BlockSpec((pl.Squeezed(), tn, D), lambda b, i, j: (b, i, 0)),
                pl.BlockSpec((pl.Squeezed(), tm, D), lambda b, i, j: (b, j, 0)),
            ],
            out_specs=pl.BlockSpec(
                (pl.Squeezed(), tn, tm), lambda b, i, j: (b, i, j)
            ),
        ),
        compiler_params=pltpu.CompilerParams(
            dimension_semantics=("parallel", "parallel", "parallel"),
        ),
        cost_estimate=cost,
    )(z_0, z_1)

    if Np != N or Mp != M:
        out = out[:, :N, :M]

    # Matches torch `adj.reshape(B, 1, N, M)` — pure metadata, keep in JAX.
    return out.reshape(B, 1, N, M)


def _reference(z_0, z_1):
    return jax.nn.sigmoid(jnp.einsum("bnd,bmd->bnm", z_0, z_1))[:, None]


if __name__ == "__main__":
    key = jax.random.PRNGKey(0)
    k0, k1, k2, k3 = jax.random.split(key, 4)

    # Small test, shapes consistent with the module (batch=2, seq=8, hidden=32).
    B, N, M, D = 2, 8, 8, 32
    z_0 = jax.random.normal(k0, (B, N, D), dtype=jnp.float32)
    z_1 = jax.random.normal(k1, (B, M, D), dtype=jnp.float32)
    adj = jax.block_until_ready(inner_product_decoder(z_0, z_1))
    ref = _reference(z_0, z_1)
    assert adj.shape == (B, 1, N, M), adj.shape
    assert jnp.allclose(adj, ref, atol=1e-5, rtol=1e-5), "mismatch vs reference"

    # Ragged (non-8/128-aligned) dims exercise the full-extent block path.
    B2, N2, M2, D2 = 1, 10, 12, 16
    z_0b = jax.random.normal(k2, (B2, N2, D2), dtype=jnp.float32)
    z_1b = jax.random.normal(k3, (B2, M2, D2), dtype=jnp.float32)
    adj_b = jax.block_until_ready(inner_product_decoder(z_0b, z_1b))
    ref_b = _reference(z_0b, z_1b)
    assert adj_b.shape == (B2, 1, N2, M2), adj_b.shape
    assert jnp.allclose(adj_b, ref_b, atol=1e-5, rtol=1e-5), "mismatch vs reference"

    print("KERNEL_OK")
</pallas_src>

<mosaic_0001>
module attributes {stable_mosaic.version = 11 : i64} {
  func.func @_inner_product_decoder_kernel(%arg0: i32, %arg1: i32, %arg2: i32, %arg3: memref<1x8x32xf32, #tpu.memory_space<vmem>>, %arg4: memref<1x8x32xf32, #tpu.memory_space<vmem>>, %arg5: memref<1x8x8xf32, #tpu.memory_space<vmem>>) attributes {dimension_semantics = [#tpu.dimension_semantics<parallel>, #tpu.dimension_semantics<parallel>, #tpu.dimension_semantics<parallel>], iteration_bounds = array<i64: 2, 1, 1>, scalar_prefetch = 0 : i64, scratch_operands = 0 : i64, tpu.core_type = #tpu.core_type<tc>, window_params = [{transform_indices = @transform_0, window_bounds = array<i64: 1, 8, 32>}, {transform_indices = @transform_1, window_bounds = array<i64: 1, 8, 32>}, {transform_indices = @transform_2, window_bounds = array<i64: 1, 8, 8>}]} {
    %c0 = arith.constant 0 : index
    %c0_0 = arith.constant 0 : index
    %c0_1 = arith.constant 0 : index
    %0 = vector.load %arg3[%c0, %c0_0, %c0_1] : memref<1x8x32xf32, #tpu.memory_space<vmem>>, vector<1x8x32xf32>
    %1 = vector.shape_cast %0 : vector<1x8x32xf32> to vector<8x32xf32>
    %c0_2 = arith.constant 0 : index
    %c0_3 = arith.constant 0 : index
    %c0_4 = arith.constant 0 : index
    %2 = vector.load %arg4[%c0_2, %c0_3, %c0_4] : memref<1x8x32xf32, #tpu.memory_space<vmem>>, vector<1x8x32xf32>
    %3 = vector.shape_cast %2 : vector<1x8x32xf32> to vector<8x32xf32>
    %cst = arith.constant dense<0.000000e+00> : vector<8x8xf32>
    %4 = tpu.matmul %1, %3, %cst {dimension_numbers = #tpu.dot_dimension_numbers<[1], [1], [0], [0], [0, 0, 1, 0], [], []>} : vector<8x32xf32>, vector<8x32xf32>, vector<8x8xf32> -> vector<8x8xf32>
    %5 = arith.negf %4 : vector<8x8xf32>
    %6 = math.exp %5 : vector<8x8xf32>
    %cst_5 = arith.constant 1.000000e+00 : f32
    %7 = vector.broadcast %cst_5 : f32 to vector<8x8xf32>
    %8 = arith.addf %7, %6 : vector<8x8xf32>
    %9 = arith.divf %7, %8 : vector<8x8xf32>
    %c0_6 = arith.constant 0 : index
    %c0_7 = arith.constant 0 : index
    %c0_8 = arith.constant 0 : index
    %10 = vector.load %arg5[%c0_6, %c0_7, %c0_8] : memref<1x8x8xf32, #tpu.memory_space<vmem>>, vector<1x8x8xf32>
    %11 = vector.shape_cast %10 : vector<1x8x8xf32> to vector<8x8xf32>
    %12 = vector.shape_cast %9 : vector<8x8xf32> to vector<1x8x8xf32>
    tpu.vector_store %arg5[%c0_6, %c0_7, %c0_8], %12 {strides = array<i32>} : memref<1x8x8xf32, #tpu.memory_space<vmem>>, vector<1x8x8xf32>,
    return
  }
  func.func @transform_0(%arg0: i32, %arg1: i32, %arg2: i32) -> (i32, i32, i32) {
    %c0_i32 = arith.constant 0 : i32
    %c0_i32_0 = arith.constant 0 : i32
    return %arg0, %arg1, %c0_i32 : i32, i32, i32
  }
  func.func @transform_1(%arg0: i32, %arg1: i32, %arg2: i32) -> (i32, i32, i32) {
    %c0_i32 = arith.constant 0 : i32
    %c0_i32_0 = arith.constant 0 : i32
    return %arg0, %arg2, %c0_i32 : i32, i32, i32
  }
  func.func @transform_2(%arg0: i32, %arg1: i32, %arg2: i32) -> (i32, i32, i32) {
    %c0_i32 = arith.constant 0 : i32
    return %arg0, %arg1, %arg2 : i32, i32, i32
  }
}

</mosaic_0001>

<llo_original>
// kernel: tpu_custom_call.1
$region0: #{tpu_custom_call.1}
  #allocation0 [shape = 'u32[]', space=smem, size = 0x4, offset = 0x4, fixed_abs, tag = 'smem constant byte address 0x4 - core index']
  #allocation1 [shape = 'u32[144,128]{1,0:T(1,128)}', space=vmem, size = 0x12000, scoped, tag = 'internal scratch']
  %s0 = inlined_call_operand.hbm [shape: f32[2,8,32], index: 0, kind: input, shape index: {}]
  %s1 = inlined_call_operand.hbm [shape: f32[2,8,32], index: 1, kind: input, shape index: {}]
  %s2 = inlined_call_operand.hbm [shape: f32[2,8,8], index: 2, kind: output, shape index: {}]
  %s3 = sld [smem:[#allocation0]]
  $region49: #{tpu_custom_call.1} parent=0
    _
  %s5 = ssub.s32 1, %s3
  %s6 = scalar_select 0, %s5, %s3
  $region1: #{tpu_custom_call.1} parent=0
    #allocation2 [shape = 'u8[8192]{0}', space=vmem, size = 0x2000, scoped, tag = 'input window, operand 0']
    #allocation3 [shape = 's32[2]{0}', space=sflag, size = 0x8, scoped, tag = 'scoped memory for tpu_custom_call.1']
    #allocation4 [shape = 's32[2]{0}', space=sflag, size = 0x8, scoped, tag = 'scoped memory for tpu_custom_call.1']
    #allocation5 [shape = 'u8[8192]{0}', space=vmem, size = 0x2000, scoped, tag = 'input window, operand 1']
    #allocation6 [shape = 's32[2]{0}', space=sflag, size = 0x8, scoped, tag = 'scoped memory for tpu_custom_call.1']
    #allocation7 [shape = 'u8[8192]{0}', space=vmem, size = 0x2000, scoped, tag = 'output window, operand 0']
    %7 = vsyncpa [#allocation3], 0
    %s8 = scalar_lea.sflag [#allocation3], 1
    %9 = vsyncpa %s8, 0
    %10 = vsyncpa [#allocation6], 0
    %s11 = scalar_lea.sflag [#allocation6], 1
    %12 = vsyncpa %s11, 0
    %13 = vsyncpa [#allocation4], 0
    %s14 = scalar_lea.sflag [#allocation4], 1
    %15 = vsyncpa %s14, 0
    loop: start=0, step=1, limit=4
    $region2: #{tpu_custom_call.1} parent=1 // loop_pre_header
      _
    $region3: #{tpu_custom_call.1} parent=1 // loop_header
      %s17 = sphi 0, %s21
      %p18 = scmp.ge.s32.totalorder %s17, 4
      %s24 = sphi 0, %s43
      %s25 = sphi 0, %s39
      %s26 = sphi 0, %s35
      %s27 = sphi 0, %s24
      %s28 = sphi 0, %s25
      %s29 = sphi 0, %s26
      %s30 = sphi 0, %s27
      %s31 = sphi 0, %s28
      %s32 = sphi 0, %s29
      %s48 = sphi 0, %s50
      %s51 = sphi 0, %s48
      %s52 = sphi 0, %s51
      %s68 = sphi 0, %s52
      %s76 = sphi 0, %s78
      %s79 = sphi 0, %s76
      %s80 = sphi 0, %s79
      %s96 = sphi 0, %s80
      %s106 = sphi 0, %s108
      %s109 = sphi 0, %s106
      %s110 = sphi 0, %s109
      %s126 = sphi 0, %s110
    $region4: #{tpu_custom_call.1} parent=1 // loop_header_branch
      %20 = sbr.rel (%p18) target = $region8
    $region5: #{tpu_custom_call.1} parent=1 // loop_body
      %s22 = ssub.s32 %s17, 1
      %s23 = ssub.s32 %s17, 2
      %s33 = sadd.s32 1, %s26
      %p34 = scmp.ge.s32.totalorder %s33, 1
      %s35 = scalar_select %p34, 0, %s33
      %s36 = sadd.s32 1, %s25
      %s37 = scalar_select %p34, %s36, %s25
      %p38 = scmp.ge.s32.totalorder %s37, 1
      %s39 = scalar_select %p38, 0, %s37
      %s40 = sadd.s32 1, %s24
      %s41 = scalar_select %p38, %s40, %s24
      %p42 = scmp.ge.s32.totalorder %s41, 2
      %s43 = scalar_select %p42, 0, %s41
      %s44 = ssub.s32 %s24, %s43
      %s45 = ssub.s32 %s25, %s39
      %s46 = sor.u32 %s44, %s45
      %p47 = scmp.eq.s32.totalorder %s46, 0
      %s49 = sadd.s32 %s48, 1
      %s50 = scalar_select %p47, %s48, %s49
      %p53 = pneg %p47
      %p54 = scmp.eq.s32.totalorder %s17, 1
      %p55 = por %p53, %p54
      %p56 = scmp.ne.s32.totalorder %s48, %s51
      %p57 = scmp.eq.s32.totalorder %s17, 0
      %p58 = por %p56, %p57
      %p59 = scmp.ne.s32.totalorder %s48, %s51
      %p60 = scmp.eq.s32.totalorder %s22, 1
      %p61 = por %p59, %p60
      %p62 = scmp.ne.s32.totalorder %s51, %s52
      %p63 = scmp.eq.s32.totalorder %s22, 0
      %p64 = por %p62, %p63
      %p65 = scmp.ne.s32.totalorder %s51, %s52
      %p66 = scmp.eq.s32.totalorder %s23, 1
      %p67 = por %p65, %p66
      %p69 = scmp.ne.s32.totalorder %s52, %s68
      %p70 = scmp.eq.s32.totalorder %s23, 0
      %p71 = por %p69, %p70
      %s72 = ssub.s32 %s24, %s43
      %s73 = ssub.s32 %s26, %s35
      %s74 = sor.u32 %s72, %s73
      %p75 = scmp.eq.s32.totalorder %s74, 0
      %s77 = sadd.s32 %s76, 1
      %s78 = scalar_select %p75, %s76, %s77
      %p81 = pneg %p75
      %p82 = scmp.eq.s32.totalorder %s17, 1
      %p83 = por %p81, %p82
      %p84 = scmp.ne.s32.totalorder %s76, %s79
      %p85 = scmp.eq.s32.totalorder %s17, 0
      %p86 = por %p84, %p85
      %p87 = scmp.ne.s32.totalorder %s76, %s79
      %p88 = scmp.eq.s32.totalorder %s22, 1
      %p89 = por %p87, %p88
      %p90 = scmp.ne.s32.totalorder %s79, %s80
      %p91 = scmp.eq.s32.totalorder %s22, 0
      %p92 = por %p90, %p91
      %p93 = scmp.ne.s32.totalorder %s79, %s80
      %p94 = scmp.eq.s32.totalorder %s23, 1
      %p95 = por %p93, %p94
      %p97 = scmp.ne.s32.totalorder %s80, %s96
      %p98 = scmp.eq.s32.totalorder %s23, 0
      %p99 = por %p97, %p98
      %s100 = ssub.s32 %s24, %s43
      %s101 = ssub.s32 %s25, %s39
      %s102 = sor.u32 %s100, %s101
      %s103 = ssub.s32 %s26, %s35
      %s104 = sor.u32 %s102, %s103
      %p105 = scmp.eq.s32.totalorder %s104, 0
      %s107 = sadd.s32 %s106, 1
      %s108 = scalar_select %p105, %s106, %s107
      %p111 = pneg %p105
      %p112 = scmp.eq.s32.totalorder %s17, 1
      %p113 = por %p111, %p112
      %p114 = scmp.ne.s32.totalorder %s106, %s109
      %p115 = scmp.eq.s32.totalorder %s17, 0
      %p116 = por %p114, %p115
      %p117 = scmp.ne.s32.totalorder %s106, %s109
      %p118 = scmp.eq.s32.totalorder %s22, 1
      %p119 = por %p117, %p118
      %p120 = scmp.ne.s32.totalorder %s109, %s110
      %p121 = scmp.eq.s32.totalorder %s22, 0
      %p122 = por %p120, %p121
      %p123 = scmp.ne.s32.totalorder %s109, %s110
      %p124 = scmp.eq.s32.totalorder %s23, 1
      %p125 = por %p123, %p124
      %p127 = scmp.ne.s32.totalorder %s110, %s126
      %p128 = scmp.eq.s32.totalorder %s23, 0
      %p129 = por %p127, %p128
      %p130 = scmp.le.s32.totalorder 1, %s17
      %p131 = scmp.lt.s32.totalorder %s17, 3
      %p132 = pnand %p130, %p131
      %p133 = pneg %p132
      // Predicated region
      $region9: #{tpu_custom_call.1} parent=5 // pred_check
        _
      $region10: #{tpu_custom_call.1} parent=5 // pred_check_branch
        %135 = sbr.rel (%p132) target = $region12
      $region11: #{tpu_custom_call.1} parent=5 // pred_region
        %s136 = ssub.s32 %s17, 1
      $region12: #{tpu_custom_call.1} parent=5 // pred_fallthru
        _
      %p137 = scmp.lt.s32.totalorder %s17, 2
      // Predicated region
      $region13: #{tpu_custom_call.1} parent=5 // pred_check
        %p138 = pneg %p137
      $region14: #{tpu_custom_call.1} parent=5 // pred_check_branch
        %140 = sbr.rel (%p138) target = $region16
      $region15: #{tpu_custom_call.1} parent=5 // pred_region
        // Predicated region
        $region17: #{tpu_custom_call.1} parent=15 // pred_check
          %p141 = pneg %p58
        $region18: #{tpu_custom_call.1} parent=15 // pred_check_branch
          %143 = sbr.rel (%p141) target = $region20
        $region19: #{tpu_custom_call.1} parent=15 // pred_region
          %s144 = sand.u32 %s48, 1
          %s145 = scalar_lea.sflag [#allocation3], %s144
          %s146 = sand.u32 %s48, 1
          %s147 = smul.addr %s146, 8
          %s148 = scalar_lea.vmem [#allocation2], %s147
          %s150 = ssub.s32 128, 128
          %151 = vsyncadd %s145, %s150
          %s152 = sadd.s32 %s25, %s24
          %s153 = smul.addr %s152, 128
          %s154 = scalar_lea.hbm %s0, %s153
          %s156 = sshll.u32 %s148, 4
          %s157 = int_to_ptr.vmem [resolvable:$true] %s156
          %159 = dma.hbm_to_vmem [thread:$0]  %s154, 128, %s157, %s145
        $region20: #{tpu_custom_call.1} parent=15 // pred_fallthru
          _
        // Predicated region
        $region21: #{tpu_custom_call.1} parent=15 // pred_check
          %p160 = pneg %p86
        $region22: #{tpu_custom_call.1} parent=15 // pred_check_branch
          %162 = sbr.rel (%p160) target = $region24
        $region23: #{tpu_custom_call.1} parent=15 // pred_region
          %s163 = sand.u32 %s76, 1
          %s164 = scalar_lea.sflag [#allocation6], %s163
          %s165 = sand.u32 %s76, 1
          %s166 = smul.addr %s165, 8
          %s167 = scalar_lea.vmem [#allocation5], %s166
          %s169 = ssub.s32 128, 128
          %170 = vsyncadd %s164, %s169
          %s171 = sadd.s32 %s26, %s24
          %s172 = smul.addr %s171, 128
          %s173 = scalar_lea.hbm %s1, %s172
          %s175 = sshll.u32 %s167, 4
          %s176 = int_to_ptr.vmem [resolvable:$true] %s175
          %178 = dma.hbm_to_vmem [thread:$0]  %s173, 128, %s176, %s164
        $region24: #{tpu_custom_call.1} parent=15 // pred_fallthru
          _
      $region16: #{tpu_custom_call.1} parent=5 // pred_fallthru
        _
      %p179 = scmp.le.s32.totalorder 1, %s17
      %p180 = scmp.lt.s32.totalorder %s17, 3
      %p181 = pnand %p179, %p180
      %p182 = pneg %p181
      // Predicated region
      $region25: #{tpu_custom_call.1} parent=5 // pred_check
        _
      $region26: #{tpu_custom_call.1} parent=5 // pred_check_branch
        %184 = sbr.rel (%p181) target = $region28
      $region27: #{tpu_custom_call.1} parent=5 // pred_region
        %s185 = ssub.s32 %s17, 1
        %s186 = sand.u32 %s51, 1
        %s187 = scalar_lea.sflag [#allocation3], %s186
        %s188 = sand.u32 %s51, 1
        %s189 = smul.addr %s188, 8
        %s190 = scalar_lea.vmem [#allocation2], %s189
        // Predicated region
        $region29: #{tpu_custom_call.1} parent=27 // pred_check
          %p191 = pneg %p64
        $region30: #{tpu_custom_call.1} parent=27 // pred_check_branch
          %193 = sbr.rel (%p191) target = $region32
        $region31: #{tpu_custom_call.1} parent=27 // pred_region
          %194 = dma.done %s187, 128
        $region32: #{tpu_custom_call.1} parent=27 // pred_fallthru
          _
        %s195 = sand.u32 %s79, 1
        %s196 = scalar_lea.sflag [#allocation6], %s195
        %s197 = sand.u32 %s79, 1
        %s198 = smul.addr %s197, 8
        %s199 = scalar_lea.vmem [#allocation5], %s198
        // Predicated region
        $region33: #{tpu_custom_call.1} parent=27 // pred_check
          %p200 = pneg %p92
        $region34: #{tpu_custom_call.1} parent=27 // pred_check_branch
          %202 = sbr.rel (%p200) target = $region36
        $region35: #{tpu_custom_call.1} parent=27 // pred_region
          %203 = dma.done %s196, 128
        $region36: #{tpu_custom_call.1} parent=27 // pred_fallthru
          _
        %s204 = sand.u32 %s51, 1
        %s205 = scalar_lea.sflag [#allocation3], %s204
        %s206 = sand.u32 %s51, 1
        %s207 = smul.addr %s206, 8
        %s208 = scalar_lea.vmem [#allocation2], %s207
        %p209 = pneg %p64
        %p210 = pneg %p61
        %s211 = sand.u32 %s79, 1
        %s212 = scalar_lea.sflag [#allocation6], %s211
        %s213 = sand.u32 %s79, 1
        %s214 = smul.addr %s213, 8
        %s215 = scalar_lea.vmem [#allocation5], %s214
        %p216 = pneg %p92
        %p217 = pneg %p89
        %p218 = pneg %p122
        %p219 = pneg %p119
        %s220 = sand.u32 %s109, 1
        %s221 = scalar_lea.sflag [#allocation4], %s220
        %s222 = sand.u32 %s109, 1
        %s223 = smul.addr %s222, 8
        %s224 = scalar_lea.vmem [#allocation7], %s223
        %v225 = vld [vmem:[%s190] sm:$0xff]
        %v226 = vld [vmem:[%s199] sm:$0xff]
        %vm227 = vcmask 261120
        %v229 = vsel %vm227, %v225, 0
        %v232 = vsel %vm227, %v226, 0
        %234 = vmatprep.subr.mxu0 0.0
        %235 = vmatpush1.xpose.msra.mxu0 %v232
        %236 = vmatprep.subr.mxu0 0.0
        %237 = vmatpush1.xpose.msra.mxu0 0.0
        %238 = vmatprep.subr.mxu0 0.0
        %239 = vmatpush1.xpose.msra.mxu0 0.0
        %240 = vmatprep.subr.mxu0 0.0
        %241 = vmatpush1.xpose.msra.mxu0 0.0
        %242 = vmatprep.subr.mxu0 0.0
        %243 = vmatpush1.xpose.msra.mxu0 0.0
        %244 = vmatprep.subr.mxu0 0.0
        %245 = vmatpush1.xpose.msra.mxu0 0.0
        %246 = vmatprep.subr.mxu0 0.0
        %247 = vmatpush1.xpose.msra.mxu0 0.0
        %248 = vmatprep.subr.mxu0 0.0
        %249 = vmatpush1.xpose.msra.mxu0 0.0
        %250 = vmatprep.subr.mxu0 0.0
        %251 = vmatpush1.xpose.msra.mxu0 0.0
        %252 = vmatprep.subr.mxu0 0.0
        %253 = vmatpush1.xpose.msra.mxu0 0.0
        %254 = vmatprep.subr.mxu0 0.0
        %255 = vmatpush1.xpose.msra.mxu0 0.0
        %256 = vmatprep.subr.mxu0 0.0
        %257 = vmatpush1.xpose.msra.mxu0 0.0
        %258 = vmatprep.subr.mxu0 0.0
        %259 = vmatpush1.xpose.msra.mxu0 0.0
        %260 = vmatprep.subr.mxu0 0.0
        %261 = vmatpush1.xpose.msra.mxu0 0.0
        %262 = vmatprep.subr.mxu0 0.0
        %263 = vmatpush1.xpose.msra.mxu0 0.0
        %264 = vmatprep.subr.mxu0 0.0
        %265 = vmatpush1.xpose.msra.mxu0 0.0
        %266 = vmatprep.subr.mxu0 0.0
        %267 = vmatpush1.xpose.msra.mxu0 0.0
        %268 = vmatprep.subr.mxu0 0.0
        %269 = vmatpush1.xpose.msra.mxu0 0.0
        %270 = vmatprep.subr.mxu0 0.0
        %271 = vmatpush1.xpose.msra.mxu0 0.0
        %272 = vmatprep.subr.mxu0 0.0
        %273 = vmatpush1.xpose.msra.mxu0 0.0
        %274 = vmatprep.subr.mxu0 0.0
        %275 = vmatpush1.xpose.msra.mxu0 0.0
        %276 = vmatprep.subr.mxu0 0.0
        %277 = vmatpush1.xpose.msra.mxu0 0.0
        %278 = vmatprep.subr.mxu0 0.0
        %279 = vmatpush1.xpose.msra.mxu0 0.0
        %280 = vmatprep.subr.mxu0 0.0
        %281 = vmatpush1.xpose.msra.mxu0 0.0
        %282 = vmatprep.subr.mxu0 0.0
        %283 = vmatpush1.xpose.msra.mxu0 0.0
        %284 = vmatprep.subr.mxu0 0.0
        %285 = vmatpush1.xpose.msra.mxu0 0.0
        %286 = vmatprep.subr.mxu0 0.0
        %287 = vmatpush1.xpose.msra.mxu0 0.0
        %288 = vmatprep.subr.mxu0 0.0
        %289 = vmatpush1.xpose.msra.mxu0 0.0
        %290 = vmatprep.subr.mxu0 0.0
        %291 = vmatpush1.xpose.msra.mxu0 0.0
        %292 = vmatprep.subr.mxu0 0.0
        %293 = vmatpush1.xpose.msra.mxu0 0.0
        %294 = vmatprep.subr.mxu0 0.0
        %295 = vmatpush1.xpose.msra.mxu0 0.0
        %296 = vmatprep.subr.mxu0 0.0
        %297 = vmatpush1.xpose.msra.mxu0 0.0
        %298 = vmatprep.mubr.f32.mxu0 0.0
        %299 = vmatmul.mubr.f32.gmra.mrb[0].mxu0 %v229
        %v300 = vpop.f32.mrb[0].mxu0
        %v301 = vadd.f32 0.0, %v300
        %v302 = vpop.f32.mrb[0].mxu0
        %303 = vdwg.mxu0
        %v304 = vxor.u32 %v301, 2147483648
        %v305 = vmul.f32 %v304, 1.442695
        %v306 = vpow.pop %v305
        %v307 = vadd.f32 %v306, 1.0
        %v308 = vrcp.pop %v307
        %v309 = vmul.f32 1.0, %v308
        %vm310 = vcmask 64512
        %311 = vst.msk [vmem:[%s224] sm:$0xff] %vm310, %v309
        %s312 = sand.u32 %s109, 1
        %s313 = scalar_lea.sflag [#allocation4], %s312
        %s314 = sand.u32 %s109, 1
        %s315 = smul.addr %s314, 8
        %s316 = scalar_lea.vmem [#allocation7], %s315
        // Predicated region
        $region37: #{tpu_custom_call.1} parent=27 // pred_check
          %p317 = pneg %p119
        $region38: #{tpu_custom_call.1} parent=27 // pred_check_branch
          %319 = sbr.rel (%p317) target = $region40
        $region39: #{tpu_custom_call.1} parent=27 // pred_region
          %s321 = ssub.s32 128, 128
          %322 = vsyncadd %s313, %s321
          %s323 = sadd.s32 %s29, %s28
          %s324 = sadd.s32 %s323, %s27
          %s325 = smul.addr %s324, 128
          %s326 = scalar_lea.hbm %s2, %s325
          %s328 = sshll.u32 %s316, 4
          %s329 = int_to_ptr.vmem [resolvable:$true] %s328
          %331 = dma.vmem_to_hbm [thread:$0]  %s329, 128, %s326, %s313
        $region40: #{tpu_custom_call.1} parent=27 // pred_fallthru
          _
      $region28: #{tpu_custom_call.1} parent=5 // pred_fallthru
        _
      %p332 = scmp.le.s32.totalorder 2, %s17
      // Predicated region
      $region41: #{tpu_custom_call.1} parent=5 // pred_check
        %p333 = pneg %p332
      $region42: #{tpu_custom_call.1} parent=5 // pred_check_branch
        %335 = sbr.rel (%p333) target = $region44
      $region43: #{tpu_custom_call.1} parent=5 // pred_region
        %s336 = ssub.s32 %s17, 2
        // Predicated region
        $region45: #{tpu_custom_call.1} parent=43 // pred_check
          %p337 = pneg %p125
        $region46: #{tpu_custom_call.1} parent=43 // pred_check_branch
          %339 = sbr.rel (%p337) target = $region48
        $region47: #{tpu_custom_call.1} parent=43 // pred_region
          %s340 = sand.u32 %s110, 1
          %s341 = scalar_lea.sflag [#allocation4], %s340
          %s342 = sand.u32 %s110, 1
          %s343 = smul.addr %s342, 8
          %s344 = scalar_lea.vmem [#allocation7], %s343
          %345 = dma.done %s341, 128
        $region48: #{tpu_custom_call.1} parent=43 // pred_fallthru
          _
      $region44: #{tpu_custom_call.1} parent=5 // pred_fallthru
        _
    $region6: #{tpu_custom_call.1} parent=1 // loop_footer
      %s21 = sadd.s32 1, %s17
    $region7: #{tpu_custom_call.1} parent=1 // loop_footer_branch
      %16 = sbr.rel target = $region3
    $region8: #{tpu_custom_call.1} parent=1 // loop_exit
      _
    %346 = vsyncpa [#allocation3], 1
    %s347 = scalar_lea.sflag [#allocation3], 1
    %348 = vsyncpa %s347, 1
    %349 = vsyncpa [#allocation6], 1
    %s350 = scalar_lea.sflag [#allocation6], 1
    %351 = vsyncpa %s350, 1
    %352 = vsyncpa [#allocation4], 1
    %s353 = scalar_lea.sflag [#allocation4], 1
    %354 = vsyncpa %s353, 1

</llo_original>
